<compile_context>
chip_gen: v5e
topology: v5e:2x2
jax: 0.10.0
libtpu: 0.0.40
codegen_flags: <defaults>
</compile_context>

<pallas_src>
import jax
import jax.numpy as jnp
from jax.experimental import pallas as pl
from jax.experimental.pallas import tpu as pltpu


def _pick_div_tile(dim, pref, align):
    """Largest multiple of `align` that divides `dim` and is <= pref; else full dim."""
    if dim >= align and dim % align == 0:
        t = min(pref, dim)
        t -= t % align
        while t >= align:
            if dim % t == 0:
                return t
            t -= align
    # TODO(synk): awkward dims fall back to a full-extent block; very large
    # un-tileable shapes should use a cdiv grid with masked tail tiles.
    return dim


def _vmem_limit_bytes():
    """Scoped-VMEM limit: ~3/4 of physical capacity, clamped to [32, 100] MiB."""
    cap = 64 << 20                       # conservative default (v7x per-TC VMEM)
    try:
        cap = int(pltpu.get_tpu_info().vmem_capacity_bytes)
    except Exception:
        pass
    return max(32 << 20, min((cap * 3) // 4, 100 << 20))


# ----------------------------------------------------------------------------
# Conditioning MLP, stage 1:  h = SiLU(e @ W1 + b1),  e = SiLU(emb) (wrapper).
# grid = (6D // TK1,)  — each W1 column slab is read from HBM exactly once.
# ----------------------------------------------------------------------------
def _mlp_stage1_kernel(e_ref, w1_ref, b1_ref, h_ref):
    h = jnp.dot(e_ref[...], w1_ref[...], preferred_element_type=jnp.float32)
    h = h + b1_ref[...].astype(jnp.float32)
    h_ref[...] = (h * jax.nn.sigmoid(h)).astype(h_ref.dtype)      # SiLU in f32


# ----------------------------------------------------------------------------
# Conditioning MLP, stage 2:  out6 = h @ W2 + b2.
# grid = (6D // TN, 6D // TK) — n parallel (output columns), k reduction.
# Each W2 tile is read exactly once; h is tiny and streamed per k-slab.
# ----------------------------------------------------------------------------
def _mlp_stage2_kernel(h_ref, w2_ref, b2_ref, out_ref, acc_ref):
    k = pl.program_id(1)

    @pl.when(k == 0)
    def _():
        acc_ref[...] = jnp.zeros_like(acc_ref)

    acc_ref[...] += jnp.dot(h_ref[...], w2_ref[...],
                            preferred_element_type=jnp.float32)

    @pl.when(k == pl.num_programs(1) - 1)
    def _():
        out_ref[...] = (acc_ref[...] +
                        b2_ref[...].astype(jnp.float32)).astype(out_ref.dtype)


# ----------------------------------------------------------------------------
# Fused LayerNorm (eps=1e-6, no affine) + adaLN-Zero modulation.
# Single FMA on raw x: out = (x - mean) * (rstd * (1+scale_msa)) + shift_msa.
# ----------------------------------------------------------------------------
def _ln_mod_kernel(scale1_ref, shift_ref, x_ref, x_out_ref):
    x32 = x_ref[0].astype(jnp.float32)                            # (TS, D)
    inv_d = 1.0 / x32.shape[-1]
    mean = jnp.sum(x32, axis=-1, keepdims=True) * inv_d           # (TS, 1)
    ex2 = jnp.sum(x32 * x32, axis=-1, keepdims=True) * inv_d      # (TS, 1)
    rstd = jax.lax.rsqrt(ex2 - mean * mean + 1e-6)                # (TS, 1)

    s1 = scale1_ref[0].astype(jnp.float32)                        # (1, D) = 1+scale_msa
    sh = shift_ref[0].astype(jnp.float32)                         # (1, D)

    x_out_ref[0] = ((x32 - mean) * (rstd * s1) + sh).astype(x_out_ref.dtype)


def dual_timestep_adaln_zero(x, emb, w1, b1, w2, b2):
    """
    x:   (B, S, D)   hidden states
    emb: (B, 2*D)    concatenated [temb, remb]
    w1:  (2*D, 6*D)  first linear (transposed to in x out)
    b1:  (6*D,)
    w2:  (6*D, 6*D)  second linear (in x out)
    b2:  (6*D,)
    """
    B, S, D = x.shape
    two_d, six_d = 2 * D, 6 * D
    assert emb.shape == (B, two_d)
    assert w1.shape == (two_d, six_d) and w2.shape == (six_d, six_d)
    assert b1.shape == (six_d,) and b2.shape == (six_d,)

    vmem_limit = _vmem_limit_bytes()

    # ---------------- conditioning MLP (weights streamed once) --------------
    # Hoist e = SiLU(emb) (tiny (B, 2D) op); pin the MXU operand dtype.
    e = jax.nn.silu(emb.astype(jnp.float32)).astype(w1.dtype)

    w_itemsize = jnp.dtype(w1.dtype).itemsize
    usable = vmem_limit - (4 << 20)
    # Double-buffered (2D, TK1) W1 slab gets at most ~half the scoped budget.
    tk1_cap = max(128, (usable // 2) // (2 * two_d * w_itemsize))
    TK1 = _pick_div_tile(six_d, min(1024, (tk1_cap // 128) * 128), 128)

    h = pl.pallas_call(
        _mlp_stage1_kernel,
        out_shape=jax.ShapeDtypeStruct((B, six_d), w2.dtype),
        grid_spec=pltpu.PrefetchScalarGridSpec(
            num_scalar_prefetch=0,
            grid=(six_d // TK1,),
            in_specs=[
                pl.BlockSpec(memory_space=pltpu.MemorySpace.VMEM),   # e (B,2D) resident
                pl.BlockSpec((two_d, TK1), lambda n: (0, n)),        # W1 column slab
                pl.BlockSpec((1, TK1),     lambda n: (0, n)),        # b1 slab
            ],
            out_specs=pl.BlockSpec((B, TK1), lambda n: (0, n)),
        ),
        compiler_params=pltpu.CompilerParams(
            dimension_semantics=("parallel",),
            vmem_limit_bytes=vmem_limit),
    )(e, w1, b1.reshape(1, six_d))

    TN = _pick_div_tile(six_d, 512, 128)   # multiple of 256 when possible (MXU shape)
    TK = _pick_div_tile(six_d, 512, 128)

    out6 = pl.pallas_call(
        _mlp_stage2_kernel,
        out_shape=jax.ShapeDtypeStruct((B, six_d), emb.dtype),
        grid_spec=pltpu.PrefetchScalarGridSpec(
            num_scalar_prefetch=0,
            grid=(six_d // TN, six_d // TK),
            in_specs=[
                pl.BlockSpec((B, TK),  lambda n, k: (0, k)),         # h k-slab (tiny)
                pl.BlockSpec((TK, TN), lambda n, k: (k, n)),         # W2 tile (read once)
                pl.BlockSpec((1, TN),  lambda n, k: (0, n)),         # b2 n-slab
            ],
            out_specs=pl.BlockSpec((B, TN), lambda n, k: (0, n)),
            scratch_shapes=[pltpu.VMEM((B, TN), jnp.float32)],
        ),
        compiler_params=pltpu.CompilerParams(
            dimension_semantics=("parallel", "arbitrary"),
            vmem_limit_bytes=vmem_limit),
    )(h, w2, b2.reshape(1, six_d))

    # Split the lane-dense slab in XLA (tiny (B, 6D) array; these ARE the
    # returned gate/shift/scale outputs -- no extra small masked stores).
    shift_msa = out6[:, 0 * D:1 * D]
    scale_msa = out6[:, 1 * D:2 * D]
    gate_msa  = out6[:, 2 * D:3 * D]
    shift_mlp = out6[:, 3 * D:4 * D]
    scale_mlp = out6[:, 4 * D:5 * D]
    gate_mlp  = out6[:, 5 * D:6 * D]

    # Precompute (1+scale) so the per-tile body is a single FMA; shape (B,1,D)
    # so BlockSpec delivers one (1,1,D) row per batch (no in-kernel dyn slice).
    scale1 = (1.0 + scale_msa.astype(jnp.float32)).reshape(B, 1, D)
    shift  = shift_msa.astype(jnp.float32).reshape(B, 1, D)

    # ---------------- LayerNorm + modulation over (B, S, D) -----------------
    itemsize = jnp.dtype(x.dtype).itemsize
    # 2 in + 2 out pipeline buffers at the NATIVE dtype, plus ~3 f32 (TS, D)
    # in-kernel temporaries; leave a small margin for resident rows / misc.
    per_row = D * (4 * itemsize + 3 * 4)
    ts_cap = max(8, (vmem_limit - (2 << 20)) // per_row)
    align = {4: 8, 2: 16, 1: 32}.get(itemsize, 8)
    ts_pref = max(align, min(1024, (ts_cap // align) * align))
    TS = _pick_div_tile(S, ts_pref, align)
    nS = S // TS

    x_out = pl.pallas_call(
        _ln_mod_kernel,
        out_shape=jax.ShapeDtypeStruct((B, S, D), x.dtype),
        grid_spec=pltpu.PrefetchScalarGridSpec(
            num_scalar_prefetch=0,
            grid=(B * nS,),                                          # flat parallel axis
            in_specs=[
                pl.BlockSpec((1, 1, D),  lambda i: (i // nS, 0, 0)),   # (1+scale_msa) row
                pl.BlockSpec((1, 1, D),  lambda i: (i // nS, 0, 0)),   # shift_msa row
                pl.BlockSpec((1, TS, D), lambda i: (i // nS, i % nS, 0)),
            ],
            out_specs=pl.BlockSpec((1, TS, D), lambda i: (i // nS, i % nS, 0)),
        ),
        compiler_params=pltpu.CompilerParams(
            dimension_semantics=("parallel",),
            vmem_limit_bytes=vmem_limit),
    )(scale1, shift, x)

    return x_out, gate_msa, shift_mlp, scale_mlp, gate_mlp


def _reference(x, emb, w1, b1, w2, b2):
    """Pure-JAX reference mirroring the PyTorch forward."""
    e = jax.nn.silu(emb)
    h = jax.nn.silu(e @ w1 + b1)
    out6 = h @ w2 + b2
    shift_msa, scale_msa, gate_msa, shift_mlp, scale_mlp, gate_mlp = jnp.split(out6, 6, axis=1)
    mean = jnp.mean(x, axis=-1, keepdims=True)
    var = jnp.mean((x - mean) ** 2, axis=-1, keepdims=True)
    xn = (x - mean) / jnp.sqrt(var + 1e-6)
    x_out = xn * (1.0 + scale_msa[:, None, :]) + shift_msa[:, None, :]
    return x_out, gate_msa, shift_mlp, scale_mlp, gate_mlp


if __name__ == "__main__":
    B, S, D = 2, 8, 32          # batch, seq, embedding_dim (small test shapes)
    key = jax.random.PRNGKey(0)
    kx, ke, kw1, kb1, kw2, kb2 = jax.random.split(key, 6)

    x   = jax.random.normal(kx, (B, S, D), dtype=jnp.float32)
    emb = jax.random.normal(ke, (B, 2 * D), dtype=jnp.float32)

    # PyTorch Linear weights (out,in) -> stored transposed as (in,out).
    w1 = jax.random.normal(kw1, (2 * D, 6 * D), dtype=jnp.float32) * 0.05
    b1 = jax.random.normal(kb1, (6 * D,), dtype=jnp.float32) * 0.05
    w2 = jax.random.normal(kw2, (6 * D, 6 * D), dtype=jnp.float32) * 0.05
    b2 = jax.random.normal(kb2, (6 * D,), dtype=jnp.float32) * 0.05

    outs = jax.block_until_ready(dual_timestep_adaln_zero(x, emb, w1, b1, w2, b2))

    refs = _reference(x, emb, w1, b1, w2, b2)
    for o, r in zip(outs, refs):
        assert o.shape == r.shape, (o.shape, r.shape)
        assert jnp.allclose(o, r, atol=1e-4, rtol=1e-4), float(jnp.max(jnp.abs(o - r)))

    print("KERNEL_OK")
</pallas_src>

<mosaic_0001>
module attributes {stable_mosaic.version = 11 : i64} {
  func.func @_mlp_stage1_kernel(%arg0: i32, %arg1: memref<2x64xf32, #tpu.memory_space<vmem>>, %arg2: memref<64x192xf32, #tpu.memory_space<vmem>>, %arg3: memref<1x192xf32, #tpu.memory_space<vmem>>, %arg4: memref<2x192xf32, #tpu.memory_space<vmem>>) attributes {dimension_semantics = [#tpu.dimension_semantics<parallel>], iteration_bounds = array<i64: 1>, scalar_prefetch = 0 : i64, scratch_operands = 0 : i64, tpu.core_type = #tpu.core_type<tc>, window_params = [{pipeline_mode = #tpu.pipeline_mode<synchronous>, transform_indices = @transform_0, window_bounds = array<i64: 2, 64>}, {transform_indices = @transform_1, window_bounds = array<i64: 64, 192>}, {transform_indices = @transform_2, window_bounds = array<i64: 1, 192>}, {transform_indices = @transform_3, window_bounds = array<i64: 2, 192>}]} {
    %c0 = arith.constant 0 : index
    %c0_0 = arith.constant 0 : index
    %0 = vector.load %arg1[%c0, %c0_0] : memref<2x64xf32, #tpu.memory_space<vmem>>, vector<2x64xf32>
    %c0_1 = arith.constant 0 : index
    %c0_2 = arith.constant 0 : index
    %1 = vector.load %arg2[%c0_1, %c0_2] : memref<64x192xf32, #tpu.memory_space<vmem>>, vector<64x192xf32>
    %cst = arith.constant dense<0.000000e+00> : vector<2x192xf32>
    %2 = tpu.matmul %0, %1, %cst {dimension_numbers = #tpu.dot_dimension_numbers<[1], [0], [0], [1], [0, 0, 1, 1], [], []>} : vector<2x64xf32>, vector<64x192xf32>, vector<2x192xf32> -> vector<2x192xf32>
    %c0_3 = arith.constant 0 : index
    %c0_4 = arith.constant 0 : index
    %3 = vector.load %arg3[%c0_3, %c0_4] : memref<1x192xf32, #tpu.memory_space<vmem>>, vector<1x192xf32>
    %4 = vector.broadcast %3 : vector<1x192xf32> to vector<2x192xf32>
    %5 = arith.addf %2, %4 : vector<2x192xf32>
    %6 = arith.negf %5 : vector<2x192xf32>
    %7 = math.exp %6 : vector<2x192xf32>
    %cst_5 = arith.constant 1.000000e+00 : f32
    %8 = vector.broadcast %cst_5 : f32 to vector<2x192xf32>
    %9 = arith.addf %8, %7 : vector<2x192xf32>
    %10 = arith.divf %8, %9 : vector<2x192xf32>
    %11 = arith.mulf %5, %10 : vector<2x192xf32>
    %c0_6 = arith.constant 0 : index
    %c0_7 = arith.constant 0 : index
    %12 = vector.load %arg4[%c0_6, %c0_7] : memref<2x192xf32, #tpu.memory_space<vmem>>, vector<2x192xf32>
    tpu.vector_store %arg4[%c0_6, %c0_7], %11 {strides = array<i32>} : memref<2x192xf32, #tpu.memory_space<vmem>>, vector<2x192xf32>,
    return
  }
  func.func @transform_0(%arg0: i32) -> (i32, i32) {
    %c0_i32 = arith.constant 0 : i32
    %c0_i32_0 = arith.constant 0 : i32
    %c0_i32_1 = arith.constant 0 : i32
    return %c0_i32, %c0_i32_0 : i32, i32
  }
  func.func @transform_1(%arg0: i32) -> (i32, i32) {
    %c0_i32 = arith.constant 0 : i32
    %c0_i32_0 = arith.constant 0 : i32
    return %c0_i32, %arg0 : i32, i32
  }
  func.func @transform_2(%arg0: i32) -> (i32, i32) {
    %c0_i32 = arith.constant 0 : i32
    %c0_i32_0 = arith.constant 0 : i32
    return %c0_i32, %arg0 : i32, i32
  }
  func.func @transform_3(%arg0: i32) -> (i32, i32) {
    %c0_i32 = arith.constant 0 : i32
    %c0_i32_0 = arith.constant 0 : i32
    return %c0_i32, %arg0 : i32, i32
  }
}

</mosaic_0001>

<llo_original>
// kernel: tpu_custom_call.1
$region0: #{tpu_custom_call.1}
  #allocation0 [shape = 'u32[]', space=smem, size = 0x4, offset = 0x4, fixed_abs, tag = 'smem constant byte address 0x4 - core index']
  #allocation1 [shape = 'u32[72,128]{1,0:T(1,128)}', space=vmem, size = 0x9000, scoped, tag = 'internal scratch']
  %s0 = inlined_call_operand.hbm [shape: f32[2,64], index: 0, kind: input, shape index: {}]
  %s1 = inlined_call_operand.hbm [shape: f32[64,192], index: 1, kind: input, shape index: {}]
  %s2 = inlined_call_operand.hbm [shape: f32[1,192], index: 2, kind: input, shape index: {}]
  %s3 = inlined_call_operand.hbm [shape: f32[2,192], index: 3, kind: output, shape index: {}]
  %s4 = sld [smem:[#allocation0]]
  $region34: #{tpu_custom_call.1} parent=0
    _
  %s6 = ssub.s32 1, %s4
  %s7 = scalar_select 0, %s6, %s4
  $region1: #{tpu_custom_call.1} parent=0
    #allocation2 [shape = 'u8[1024]{0}', space=vmem, size = 0x400, scoped, tag = 'input window, operand 0, single buffered']
    #allocation3 [shape = 's32[1]{0}', space=sflag, size = 0x4, scoped, tag = 'scoped memory for tpu_custom_call.1']
    #allocation4 [shape = 's32[1]{0}', space=sflag, size = 0x4, scoped, tag = 'scoped memory for tpu_custom_call.1']
    #allocation5 [shape = 'u8[65536]{0}', space=vmem, size = 0x10000, scoped, tag = 'input window, operand 1, single buffered']
    #allocation6 [shape = 's32[1]{0}', space=sflag, size = 0x4, scoped, tag = 'scoped memory for tpu_custom_call.1']
    #allocation7 [shape = 'u8[1024]{0}', space=vmem, size = 0x400, scoped, tag = 'input window, operand 2, single buffered']
    #allocation8 [shape = 'u8[2048]{0}', space=vmem, size = 0x800, scoped, tag = 'output window, operand 0, single buffered']
    %8 = vsyncpa [#allocation3], 0
    %9 = vsyncpa [#allocation6], 0
    %10 = vsyncpa [#allocation4], 0
    // Predicated region
    $region2: #{tpu_custom_call.1} parent=1 // pred_check
      _
    $region3: #{tpu_custom_call.1} parent=1 // pred_check_branch
      %12 = sbr.rel (0) target = $region5
    $region4: #{tpu_custom_call.1} parent=1 // pred_region
      %14 = vsyncadd [#allocation3], 0
      %s16 = sshll.u32 %s0, 4
      %s17 = int_to_ptr.hbm [resolvable:$true] %s16
      %s18 = sshll.u32 [#allocation2], 4
      %s19 = int_to_ptr.vmem [resolvable:$true] %s18
      %21 = dma.hbm_to_vmem [thread:$0]  %s17, 32, %s19, [#allocation3]
    $region5: #{tpu_custom_call.1} parent=1 // pred_fallthru
      _
    // Predicated region
    $region6: #{tpu_custom_call.1} parent=1 // pred_check
      _
    $region7: #{tpu_custom_call.1} parent=1 // pred_check_branch
      %23 = sbr.rel (0) target = $region9
    $region8: #{tpu_custom_call.1} parent=1 // pred_region
      %25 = vsyncadd [#allocation6], 0
      %s26 = sshll.u32 %s1, 4
      %s27 = int_to_ptr.hbm [resolvable:$true] %s26
      %s28 = sshll.u32 [#allocation5], 4
      %s29 = int_to_ptr.vmem [resolvable:$true] %s28
      %34 = dma.hbm_to_vmem [thread:$0]  %s27, 2048, %s29, [#allocation6], 256, 256, 16
    $region9: #{tpu_custom_call.1} parent=1 // pred_fallthru
      _
    // Predicated region
    $region10: #{tpu_custom_call.1} parent=1 // pred_check
      _
    $region11: #{tpu_custom_call.1} parent=1 // pred_check_branch
      %36 = sbr.rel (0) target = $region13
    $region12: #{tpu_custom_call.1} parent=1 // pred_region
      %38 = vsyncadd [#allocation6], 0
      %s40 = sshll.u32 %s2, 4
      %s41 = int_to_ptr.hbm [resolvable:$true] %s40
      %s42 = sshll.u32 [#allocation7], 4
      %s43 = int_to_ptr.vmem [resolvable:$true] %s42
      %45 = dma.hbm_to_vmem [thread:$0]  %s41, 32, %s43, [#allocation6]
    $region13: #{tpu_custom_call.1} parent=1 // pred_fallthru
      _
    // Predicated region
    $region14: #{tpu_custom_call.1} parent=1 // pred_check
      _
    $region15: #{tpu_custom_call.1} parent=1 // pred_check_branch
      %47 = sbr.rel (0) target = $region17
    $region16: #{tpu_custom_call.1} parent=1 // pred_region
      %49 = dma.done [#allocation3], 32
    $region17: #{tpu_custom_call.1} parent=1 // pred_fallthru
      _
    // Predicated region
    $region18: #{tpu_custom_call.1} parent=1 // pred_check
      _
    $region19: #{tpu_custom_call.1} parent=1 // pred_check_branch
      %51 = sbr.rel (0) target = $region21
    $region20: #{tpu_custom_call.1} parent=1 // pred_region
      %53 = dma.done [#allocation6], 2048
    $region21: #{tpu_custom_call.1} parent=1 // pred_fallthru
      _
    // Predicated region
    $region22: #{tpu_custom_call.1} parent=1 // pred_check
      _
    $region23: #{tpu_custom_call.1} parent=1 // pred_check_branch
      %55 = sbr.rel (0) target = $region25
    $region24: #{tpu_custom_call.1} parent=1 // pred_region
      %57 = dma.done [#allocation6], 32
    $region25: #{tpu_custom_call.1} parent=1 // pred_fallthru
      _
    %v58 = vld [vmem:[#allocation2] sm:$0x3]
    %v59 = vld [vmem:[#allocation5] sm:$0xff]
    %v60 = vld [vmem:[#allocation5 + $0x8] sm:$0xff]
    %v61 = vld [vmem:[#allocation5 + $0x10] sm:$0xff]
    %v62 = vld [vmem:[#allocation5 + $0x18] sm:$0xff]
    %v63 = vld [vmem:[#allocation5 + $0x20] sm:$0xff]
    %v64 = vld [vmem:[#allocation5 + $0x28] sm:$0xff]
    %v65 = vld [vmem:[#allocation5 + $0x30] sm:$0xff]
    %v66 = vld [vmem:[#allocation5 + $0x38] sm:$0xff]
    %v67 = vld [vmem:[#allocation5 + $0x40] sm:$0xff]
    %v68 = vld [vmem:[#allocation5 + $0x48] sm:$0xff]
    %v69 = vld [vmem:[#allocation5 + $0x50] sm:$0xff]
    %v70 = vld [vmem:[#allocation5 + $0x58] sm:$0xff]
    %v71 = vld [vmem:[#allocation5 + $0x60] sm:$0xff]
    %v72 = vld [vmem:[#allocation5 + $0x68] sm:$0xff]
    %v73 = vld [vmem:[#allocation5 + $0x70] sm:$0xff]
    %v74 = vld [vmem:[#allocation5 + $0x78] sm:$0xff]
    %v75 = vld [vmem:[#allocation7] sm:$0x3]
    %v77 = vperm.slane %v75, 0
    %v78 = vperm.slane %v75, 1
    %vm81 = vcmask 523264
    %v83 = vsel %vm81, %v58, 0
    %85 = vmatpush.msra.mxu0 0.0
    %86 = vmatpush.msra.mxu0 0.0
    %87 = vmatpush.msra.mxu0 0.0
    %88 = vmatpush.msra.mxu0 0.0
    %89 = vmatpush.msra.mxu0 0.0
    %90 = vmatpush.msra.mxu0 0.0
    %91 = vmatpush.msra.mxu0 0.0
    %92 = vmatpush.msra.mxu0 0.0
    %93 = vmatpush.msra.mxu0 %v73
    %94 = vmatpush.msra.mxu0 %v71
    %95 = vmatpush.msra.mxu0 %v69
    %96 = vmatpush.msra.mxu0 %v67
    %97 = vmatpush.msra.mxu0 %v65
    %98 = vmatpush.msra.mxu0 %v63
    %99 = vmatpush.msra.mxu0 %v61
    %100 = vmatpush.msra.mxu0 %v59
    %101 = vmatmul.f32.gmra.mxu0 %v83
    %v102 = vpop.f32.mrf.mxu0
    %v103 = vadd.f32 %v77, %v102
    %104 = vdwg.mxu0
    %105 = vmatpush.msra.mxu0 0.0
    %106 = vmatpush.msra.mxu0 0.0
    %107 = vmatpush.msra.mxu0 0.0
    %108 = vmatpush.msra.mxu0 0.0
    %109 = vmatpush.msra.mxu0 0.0
    %110 = vmatpush.msra.mxu0 0.0
    %111 = vmatpush.msra.mxu0 0.0
    %112 = vmatpush.msra.mxu0 0.0
    %113 = vmatpush.msra.mxu0 %v74
    %114 = vmatpush.msra.mxu0 %v72
    %115 = vmatpush.msra.mxu0 %v70
    %116 = vmatpush.msra.mxu0 %v68
    %117 = vmatpush.msra.mxu0 %v66
    %118 = vmatpush.msra.mxu0 %v64
    %119 = vmatpush.msra.mxu0 %v62
    %120 = vmatpush.msra.mxu0 %v60
    %121 = vmatmul.f32.gmra.mxu0 %v83
    %v122 = vpop.f32.mrf.mxu0
    %v123 = vadd.f32 %v78, %v122
    %124 = vdwg.mxu0
    %v125 = vxor.u32 %v103, 2147483648
    %v126 = vxor.u32 %v123, 2147483648
    %v127 = vmul.f32 %v125, 1.442695
    %v128 = vpow.pop %v127
    %v129 = vmul.f32 %v126, 1.442695
    %v130 = vpow.pop %v129
    %v131 = vadd.f32 %v128, 1.0
    %v132 = vadd.f32 %v130, 1.0
    %v133 = vrcp.pop %v131
    %v134 = vmul.f32 %v131, %v133
    %v135 = vsub.f32 1.0, %v134
    %v136 = vmul.f32 %v133, %v135
    %v137 = vadd.f32 %v133, %v136
    %vm138 = vweird.f32 %v131
    %vm139 = vweird.f32 %v133
    %vm140 = vmor %vm138, %vm139
    %v141 = vsel %vm140, %v133, %v137
    %v142 = vand.u32 2147483647, %v131
    %vm143 = vcmp.eq.f32.partialorder %v142, 8.507059e+37
    %v144 = vand.u32 %v131, 2147483648
    %v145 = vor.u32 1.1754944e-38, %v144
    %v146 = vsel %vm143, %v145, %v141
    %v147 = vmul.f32 1.0, %v146
    %v148 = vrcp.pop %v132
    %v149 = vmul.f32 %v132, %v148
    %v150 = vsub.f32 1.0, %v149
    %v151 = vmul.f32 %v148, %v150
    %v152 = vadd.f32 %v148, %v151
    %vm153 = vweird.f32 %v132
    %vm154 = vweird.f32 %v148
    %vm155 = vmor %vm153, %vm154
    %v156 = vsel %vm155, %v148, %v152
    %v157 = vand.u32 2147483647, %v132
    %vm158 = vcmp.eq.f32.partialorder %v157, 8.507059e+37
    %v159 = vand.u32 %v132, 2147483648
    %v160 = vor.u32 1.1754944e-38, %v159
    %v161 = vsel %vm158, %v160, %v156
    %v162 = vmul.f32 1.0, %v161
    %v163 = vmul.f32 %v103, %v147
    %v164 = vmul.f32 %v123, %v162
    %v167 = vrot.slane %v164, 6
    %vm168 = vcmask 1041408
    %v169 = vsel %vm168, %v163, %v167
    %vm171 = vcmask 519170
    %vm172 = vmor %vm171, %vm168
    %173 = vst.msk [vmem:[#allocation8] sm:$0xf] %vm172, %v169
    // Predicated region
    $region26: #{tpu_custom_call.1} parent=1 // pred_check
      _
    $region27: #{tpu_custom_call.1} parent=1 // pred_check_branch
      %175 = sbr.rel (0) target = $region29
    $region28: #{tpu_custom_call.1} parent=1 // pred_region
      %177 = vsyncadd [#allocation4], 0
      %s179 = sshll.u32 [#allocation8], 4
      %s180 = int_to_ptr.vmem [resolvable:$true] %s179
      %s181 = sshll.u32 %s3, 4
      %s182 = int_to_ptr.hbm [resolvable:$true] %s181
      %184 = dma.vmem_to_hbm [thread:$0]  %s180, 64, %s182, [#allocation4]
    $region29: #{tpu_custom_call.1} parent=1 // pred_fallthru
      _
    // Predicated region
    $region30: #{tpu_custom_call.1} parent=1 // pred_check
      _
    $region31: #{tpu_custom_call.1} parent=1 // pred_check_branch
      %186 = sbr.rel (0) target = $region33
    $region32: #{tpu_custom_call.1} parent=1 // pred_region
      %188 = dma.done [#allocation4], 64
    $region33: #{tpu_custom_call.1} parent=1 // pred_fallthru
      _
    %189 = vsyncpa [#allocation3], 1
    %190 = vsyncpa [#allocation6], 1
    %191 = vsyncpa [#allocation4], 1

</llo_original>
